<compile_context>
chip_gen: v7x
topology: tpu7x:2x2x1
jax: 0.10.0
libtpu: 0.0.40
codegen_flags: <defaults>
</compile_context>

<pallas_src>
import jax
import jax.numpy as jnp
import numpy as np
from jax.experimental import pallas as pl
from jax.experimental.pallas import tpu as pltpu


def _pooled_abs_sums(d, pw2, pw4, dw2_s, dw4_s):
    """|avg_pool2x2(d)| sum and |avg_pool4x4(d)| sum for one (TH, W) tile."""
    TH = d.shape[0]
    # scale 2: W-pool on the MXU (averaging matrix), H-pool via stride-2 sublane reads.
    dw2_s[...] = jnp.dot(d, pw2, preferred_element_type=jnp.float32)          # (TH, W/2)
    d2 = 0.5 * (dw2_s[pl.ds(0, TH // 2, 2), :] + dw2_s[pl.ds(1, TH // 2, 2), :])
    s2 = jnp.sum(jnp.abs(d2))
    # scale 4: pool the scale-2 map once more (exact because H, W % 4 == 0).
    dw4_s[...] = jnp.dot(d2, pw4, preferred_element_type=jnp.float32)         # (TH/2, W/4)
    th2 = TH // 2
    d4 = 0.5 * (dw4_s[pl.ds(0, th2 // 2, 2), :] + dw4_s[pl.ds(1, th2 // 2, 2), :])
    s4 = jnp.sum(jnp.abs(d4))
    return s2, s4


def _texture_masked_kernel(p_ref, t_ref, m_ref, pw2_ref, pw4_ref, out_ref, dw2_s, dw4_s):
    first = (pl.program_id(0) == 0) & (pl.program_id(1) == 0) & (pl.program_id(2) == 0)

    @pl.when(first)
    def _init():
        out_ref[0] = 0.0
        out_ref[1] = 0.0
        out_ref[2] = 0.0
        out_ref[3] = 0.0

    # Cast to f32 in-kernel (native-dtype DMA; mandatory for v5e which has no bf16 VPU).
    d = p_ref[...].astype(jnp.float32) - t_ref[...].astype(jnp.float32)
    m = m_ref[...]
    out_ref[0] += jnp.sum(jnp.abs(d) * m)   # masked L1 numerator
    out_ref[1] += jnp.sum(m)                # masked element count (mask reused per channel)
    s2, s4 = _pooled_abs_sums(d, pw2_ref[...], pw4_ref[...], dw2_s, dw4_s)
    out_ref[2] += s2
    out_ref[3] += s4


def _texture_plain_kernel(p_ref, t_ref, pw2_ref, pw4_ref, out_ref, dw2_s, dw4_s):
    first = (pl.program_id(0) == 0) & (pl.program_id(1) == 0) & (pl.program_id(2) == 0)

    @pl.when(first)
    def _init():
        out_ref[0] = 0.0
        out_ref[1] = 0.0
        out_ref[2] = 0.0

    d = p_ref[...].astype(jnp.float32) - t_ref[...].astype(jnp.float32)
    out_ref[0] += jnp.sum(jnp.abs(d))
    s2, s4 = _pooled_abs_sums(d, pw2_ref[...], pw4_ref[...], dw2_s, dw4_s)
    out_ref[1] += s2
    out_ref[2] += s4


def _pool_matrix(n, k):
    # (n, n//k) matrix averaging consecutive groups of k columns (entries 0 or 1/k).
    rows = jnp.arange(n)[:, None] // k
    cols = jnp.arange(n // k)[None, :]
    return (rows == cols).astype(jnp.float32) / float(k)


def _pick_tile_h(H, W):
    """Largest H-tile (multiple of 8, dividing H) whose pipelined footprint is modest."""
    budget = 16 * 1024 * 1024                    # double-buffered inputs + scratch, 4B/elem bound
    bytes_per_row = 4 * W * (3 * 2 + 1)          # 3 inputs x 2 buffers + ~scratch rows
    th = min(H, max(8, budget // bytes_per_row))
    th = max(8, (th // 8) * 8)
    while th > 8 and H % th != 0:
        th -= 8
    if H % th != 0:
        th = H                                    # small / non-multiple-of-8 H: whole extent
    return th


def texture_loss(prediction, target, mask=None, l1_weight=1.0, perceptual_weight=0.1,
                 tile_h=None):
    B, C, H, W = prediction.shape
    assert H % 4 == 0 and W % 4 == 0, "needs H, W divisible by 4 (avg_pool2d floor not handled)"

    if tile_h is not None:
        TH = int(tile_h)
        assert H % TH == 0 and TH % 4 == 0 and (TH % 8 == 0 or TH == H)
    else:
        TH = _pick_tile_h(H, W)

    grid = (B, H // TH, C)                        # channel innermost -> mask block reuse
    pw2 = _pool_matrix(W, 2)
    pw4 = _pool_matrix(W // 2, 2)

    img_spec = pl.BlockSpec((None, None, TH, W), lambda b, h, c: (b, c, h, 0))
    mat_spec = pl.BlockSpec(memory_space=pltpu.MemorySpace.VMEM)   # resident pool matrices
    out_spec = pl.BlockSpec(memory_space=pltpu.MemorySpace.SMEM)   # resident accumulator
    scratch = [pltpu.VMEM((TH, W // 2), jnp.float32),
               pltpu.VMEM((TH // 2, W // 4), jnp.float32)]
    cparams = pltpu.CompilerParams(
        dimension_semantics=("arbitrary", "arbitrary", "arbitrary"),
        vmem_limit_bytes=48 * 1024 * 1024)

    use_mask = mask is not None and mask.ndim == 4
    if use_mask:
        mb = (mask != 0)
        if mask.shape[1] == 1:
            # Do NOT broadcast over channels: reuse the same (TH, W) block for all 3 c's.
            m_arr = mb.reshape(B, H, W).astype(jnp.float32)
            mask_spec = pl.BlockSpec((None, TH, W), lambda b, h, c: (b, h, 0))
        else:
            m_arr = jnp.broadcast_to(mb, (B, C, H, W)).astype(jnp.float32)
            mask_spec = pl.BlockSpec((None, None, TH, W), lambda b, h, c: (b, c, h, 0))

        sums = pl.pallas_call(
            _texture_masked_kernel,
            out_shape=jax.ShapeDtypeStruct((4,), jnp.float32),
            grid=grid,
            in_specs=[img_spec, img_spec, mask_spec, mat_spec, mat_spec],
            out_specs=out_spec,
            scratch_shapes=scratch,
            compiler_params=cparams,
        )(prediction, target, m_arr, pw2, pw4)
        l1_sum, m_cnt, s2_sum, s4_sum = sums[0], sums[1], sums[2], sums[3]
        # PyTorch: 0.0 when the expanded mask is all-False, else masked mean.
        l1_loss = jnp.where(m_cnt > 0, l1_sum / jnp.maximum(m_cnt, 1.0), 0.0)
    else:
        sums = pl.pallas_call(
            _texture_plain_kernel,
            out_shape=jax.ShapeDtypeStruct((3,), jnp.float32),
            grid=grid,
            in_specs=[img_spec, img_spec, mat_spec, mat_spec],
            out_specs=out_spec,
            scratch_shapes=scratch,
            compiler_params=cparams,
        )(prediction, target, pw2, pw4)
        l1_sum, s2_sum, s4_sum = sums[0], sums[1], sums[2]
        l1_loss = l1_sum / float(B * C * H * W)   # count is a trace-time constant

    if perceptual_weight > 0:
        n2 = float(B * C * (H // 2) * (W // 2))
        n4 = float(B * C * (H // 4) * (W // 4))
        perceptual = (s2_sum / n2 + s4_sum / n4) / 3.0
    else:
        perceptual = jnp.float32(0.0)

    return l1_weight * l1_loss + perceptual_weight * perceptual


def _ref_texture_loss(p, t, mask=None, l1_weight=1.0, perceptual_weight=0.1):
    # Pure-JAX reference mirroring the PyTorch module semantics.
    p = p.astype(jnp.float32)
    t = t.astype(jnp.float32)
    d = jnp.abs(p - t)
    if mask is not None and mask.ndim == 4:
        me = jnp.broadcast_to(mask != 0, p.shape)
        cnt = jnp.sum(me)
        l1 = jnp.where(cnt > 0,
                       jnp.sum(jnp.where(me, d, 0.0)) / jnp.maximum(cnt, 1),
                       0.0)
    else:
        l1 = jnp.mean(d)

    def pool(x, k):
        B, C, H, W = x.shape
        return x.reshape(B, C, H // k, k, W // k, k).mean(axis=(3, 5))

    perc = (jnp.mean(jnp.abs(pool(p, 2) - pool(t, 2)))
            + jnp.mean(jnp.abs(pool(p, 4) - pool(t, 4)))) / 3.0
    return l1_weight * l1 + perceptual_weight * perc


if __name__ == "__main__":
    key = jax.random.PRNGKey(0)
    kp, kt, km = jax.random.split(key, 3)
    B, C, H, W = 2, 3, 16, 16
    pred = jax.random.normal(kp, (B, C, H, W), jnp.float32)
    targ = jax.random.normal(kt, (B, C, H, W), jnp.float32)
    mask = jax.random.uniform(km, (B, 1, H, W)) > 0.3

    out_masked = jax.block_until_ready(texture_loss(pred, targ, mask))
    out_plain = jax.block_until_ready(texture_loss(pred, targ, None))
    # Force TH=8 (grid = (2, 2, 3)) to exercise multi-step accumulation + mask reuse.
    out_tiled = jax.block_until_ready(texture_loss(pred, targ, mask, tile_h=8))

    ref_masked = _ref_texture_loss(pred, targ, mask)
    ref_plain = _ref_texture_loss(pred, targ, None)

    assert np.allclose(np.asarray(out_masked), np.asarray(ref_masked), rtol=1e-5, atol=1e-5)
    assert np.allclose(np.asarray(out_plain), np.asarray(ref_plain), rtol=1e-5, atol=1e-5)
    assert np.allclose(np.asarray(out_tiled), np.asarray(ref_masked), rtol=1e-5, atol=1e-5)
    print("KERNEL_OK")
</pallas_src>

<mosaic_0001>
module attributes {stable_mosaic.version = 11 : i64} {
  func.func @_texture_masked_kernel(%arg0: i32, %arg1: i32, %arg2: i32, %arg3: memref<1x1x16x16xf32, #tpu.memory_space<vmem>>, %arg4: memref<1x1x16x16xf32, #tpu.memory_space<vmem>>, %arg5: memref<1x16x16xf32, #tpu.memory_space<vmem>>, %arg6: memref<16x8xf32, #tpu.memory_space<vmem>>, %arg7: memref<8x4xf32, #tpu.memory_space<vmem>>, %arg8: memref<4xf32, #tpu.memory_space<smem>>, %arg9: memref<16x8xf32, #tpu.memory_space<vmem>>, %arg10: memref<8x4xf32, #tpu.memory_space<vmem>>) attributes {dimension_semantics = [#tpu.dimension_semantics<arbitrary>, #tpu.dimension_semantics<arbitrary>, #tpu.dimension_semantics<arbitrary>], iteration_bounds = array<i64: 2, 1, 3>, scalar_prefetch = 0 : i64, scratch_operands = 2 : i64, tpu.core_type = #tpu.core_type<tc>, window_params = [{transform_indices = @transform_0, window_bounds = array<i64: 1, 1, 16, 16>}, {transform_indices = @transform_1, window_bounds = array<i64: 1, 1, 16, 16>}, {transform_indices = @transform_2, window_bounds = array<i64: 1, 16, 16>}, {pipeline_mode = #tpu.pipeline_mode<synchronous>, transform_indices = @transform_3, window_bounds = array<i64: 16, 8>}, {pipeline_mode = #tpu.pipeline_mode<synchronous>, transform_indices = @transform_4, window_bounds = array<i64: 8, 4>}, {transform_indices = @transform_5, window_bounds = array<i64: 4>}]} {
    %c0_i32 = arith.constant 0 : i32
    %0 = arith.cmpi eq, %arg0, %c0_i32 : i32
    %c0_i32_0 = arith.constant 0 : i32
    %1 = arith.cmpi eq, %arg1, %c0_i32_0 : i32
    %2 = arith.andi %0, %1 : i1
    %c0_i32_1 = arith.constant 0 : i32
    %3 = arith.cmpi eq, %arg2, %c0_i32_1 : i32
    %4 = arith.andi %2, %3 : i1
    %5 = arith.extui %4 : i1 to i32
    %c0_i32_2 = arith.constant 0 : i32
    %6 = arith.cmpi ne, %5, %c0_i32_2 : i32
    scf.if %6 {
      %cst_41 = arith.constant 0.000000e+00 : f32
      %c0_42 = arith.constant 0 : index
      %62 = memref.load %arg8[%c0_42] : memref<4xf32, #tpu.memory_space<smem>>
      memref.store %cst_41, %arg8[%c0_42] : memref<4xf32, #tpu.memory_space<smem>>
      %cst_43 = arith.constant 0.000000e+00 : f32
      %c1_44 = arith.constant 1 : index
      %63 = memref.load %arg8[%c1_44] : memref<4xf32, #tpu.memory_space<smem>>
      memref.store %cst_43, %arg8[%c1_44] : memref<4xf32, #tpu.memory_space<smem>>
      %cst_45 = arith.constant 0.000000e+00 : f32
      %c2_46 = arith.constant 2 : index
      %64 = memref.load %arg8[%c2_46] : memref<4xf32, #tpu.memory_space<smem>>
      memref.store %cst_45, %arg8[%c2_46] : memref<4xf32, #tpu.memory_space<smem>>
      %cst_47 = arith.constant 0.000000e+00 : f32
      %c3_48 = arith.constant 3 : index
      %65 = memref.load %arg8[%c3_48] : memref<4xf32, #tpu.memory_space<smem>>
      memref.store %cst_47, %arg8[%c3_48] : memref<4xf32, #tpu.memory_space<smem>>
    } else {
    }
    %c0 = arith.constant 0 : index
    %c0_3 = arith.constant 0 : index
    %c0_4 = arith.constant 0 : index
    %c0_5 = arith.constant 0 : index
    %7 = vector.load %arg3[%c0, %c0_3, %c0_4, %c0_5] : memref<1x1x16x16xf32, #tpu.memory_space<vmem>>, vector<1x1x16x16xf32>
    %8 = vector.shape_cast %7 : vector<1x1x16x16xf32> to vector<16x16xf32>
    %c0_6 = arith.constant 0 : index
    %c0_7 = arith.constant 0 : index
    %c0_8 = arith.constant 0 : index
    %c0_9 = arith.constant 0 : index
    %9 = vector.load %arg4[%c0_6, %c0_7, %c0_8, %c0_9] : memref<1x1x16x16xf32, #tpu.memory_space<vmem>>, vector<1x1x16x16xf32>
    %10 = vector.shape_cast %9 : vector<1x1x16x16xf32> to vector<16x16xf32>
    %11 = arith.subf %8, %10 : vector<16x16xf32>
    %c0_10 = arith.constant 0 : index
    %c0_11 = arith.constant 0 : index
    %c0_12 = arith.constant 0 : index
    %12 = vector.load %arg5[%c0_10, %c0_11, %c0_12] : memref<1x16x16xf32, #tpu.memory_space<vmem>>, vector<1x16x16xf32>
    %13 = vector.shape_cast %12 : vector<1x16x16xf32> to vector<16x16xf32>
    %c0_13 = arith.constant 0 : index
    %14 = memref.load %arg8[%c0_13] : memref<4xf32, #tpu.memory_space<smem>>
    %15 = math.absf %11 : vector<16x16xf32>
    %16 = arith.mulf %15, %13 : vector<16x16xf32>
    %17 = vector.shape_cast %16 : vector<16x16xf32> to vector<1x16x16xf32>
    %cst = arith.constant dense<0.000000e+00> : vector<1xf32>
    %18 = vector.multi_reduction <add>, %17, %cst [1, 2] : vector<1x16x16xf32> to vector<1xf32>
    %19 = vector.shape_cast %18 : vector<1xf32> to vector<1x1x1xf32>
    %20 = vector.extract %19[0, 0, 0] : f32 from vector<1x1x1xf32>
    %21 = arith.addf %14, %20 : f32
    %c0_14 = arith.constant 0 : index
    %22 = memref.load %arg8[%c0_14] : memref<4xf32, #tpu.memory_space<smem>>
    memref.store %21, %arg8[%c0_14] : memref<4xf32, #tpu.memory_space<smem>>
    %c1 = arith.constant 1 : index
    %23 = memref.load %arg8[%c1] : memref<4xf32, #tpu.memory_space<smem>>
    %24 = vector.shape_cast %13 : vector<16x16xf32> to vector<1x16x16xf32>
    %cst_15 = arith.constant dense<0.000000e+00> : vector<1xf32>
    %25 = vector.multi_reduction <add>, %24, %cst_15 [1, 2] : vector<1x16x16xf32> to vector<1xf32>
    %26 = vector.shape_cast %25 : vector<1xf32> to vector<1x1x1xf32>
    %27 = vector.extract %26[0, 0, 0] : f32 from vector<1x1x1xf32>
    %28 = arith.addf %23, %27 : f32
    %c1_16 = arith.constant 1 : index
    %29 = memref.load %arg8[%c1_16] : memref<4xf32, #tpu.memory_space<smem>>
    memref.store %28, %arg8[%c1_16] : memref<4xf32, #tpu.memory_space<smem>>
    %c0_17 = arith.constant 0 : index
    %c0_18 = arith.constant 0 : index
    %30 = vector.load %arg6[%c0_17, %c0_18] : memref<16x8xf32, #tpu.memory_space<vmem>>, vector<16x8xf32>
    %c0_19 = arith.constant 0 : index
    %c0_20 = arith.constant 0 : index
    %31 = vector.load %arg7[%c0_19, %c0_20] : memref<8x4xf32, #tpu.memory_space<vmem>>, vector<8x4xf32>
    %cst_21 = arith.constant dense<0.000000e+00> : vector<16x8xf32>
    %32 = tpu.matmul %11, %30, %cst_21 {dimension_numbers = #tpu.dot_dimension_numbers<[1], [0], [0], [1], [0, 0, 1, 1], [], []>} : vector<16x16xf32>, vector<16x8xf32>, vector<16x8xf32> -> vector<16x8xf32>
    %c0_22 = arith.constant 0 : index
    %c0_23 = arith.constant 0 : index
    %33 = vector.load %arg9[%c0_22, %c0_23] : memref<16x8xf32, #tpu.memory_space<vmem>>, vector<16x8xf32>
    tpu.vector_store %arg9[%c0_22, %c0_23], %32 {strides = array<i32>} : memref<16x8xf32, #tpu.memory_space<vmem>>, vector<16x8xf32>,
    %c0_24 = arith.constant 0 : index
    %c0_25 = arith.constant 0 : index
    %34 = tpu.strided_load %arg9[%c0_24, %c0_25] {strides = array<i32: 2, 1>} : memref<16x8xf32, #tpu.memory_space<vmem>>, vector<8x8xf32>
    %c1_26 = arith.constant 1 : index
    %c0_27 = arith.constant 0 : index
    %35 = tpu.strided_load %arg9[%c1_26, %c0_27] {strides = array<i32: 2, 1>} : memref<16x8xf32, #tpu.memory_space<vmem>>, vector<8x8xf32>
    %36 = arith.addf %34, %35 : vector<8x8xf32>
    %cst_28 = arith.constant 5.000000e-01 : f32
    %37 = vector.broadcast %cst_28 : f32 to vector<8x8xf32>
    %38 = arith.mulf %37, %36 : vector<8x8xf32>
    %39 = math.absf %38 : vector<8x8xf32>
    %40 = vector.shape_cast %39 : vector<8x8xf32> to vector<1x8x8xf32>
    %cst_29 = arith.constant dense<0.000000e+00> : vector<1xf32>
    %41 = vector.multi_reduction <add>, %40, %cst_29 [1, 2] : vector<1x8x8xf32> to vector<1xf32>
    %42 = vector.shape_cast %41 : vector<1xf32> to vector<1x1x1xf32>
    %43 = vector.extract %42[0, 0, 0] : f32 from vector<1x1x1xf32>
    %cst_30 = arith.constant dense<0.000000e+00> : vector<8x4xf32>
    %44 = tpu.matmul %38, %31, %cst_30 {dimension_numbers = #tpu.dot_dimension_numbers<[1], [0], [0], [1], [0, 0, 1, 1], [], []>} : vector<8x8xf32>, vector<8x4xf32>, vector<8x4xf32> -> vector<8x4xf32>
    %c0_31 = arith.constant 0 : index
    %c0_32 = arith.constant 0 : index
    %45 = vector.load %arg10[%c0_31, %c0_32] : memref<8x4xf32, #tpu.memory_space<vmem>>, vector<8x4xf32>
    tpu.vector_store %arg10[%c0_31, %c0_32], %44 {strides = array<i32>} : memref<8x4xf32, #tpu.memory_space<vmem>>, vector<8x4xf32>,
    %c0_33 = arith.constant 0 : index
    %c0_34 = arith.constant 0 : index
    %46 = tpu.strided_load %arg10[%c0_33, %c0_34] {strides = array<i32: 2, 1>} : memref<8x4xf32, #tpu.memory_space<vmem>>, vector<4x4xf32>
    %c1_35 = arith.constant 1 : index
    %c0_36 = arith.constant 0 : index
    %47 = tpu.strided_load %arg10[%c1_35, %c0_36] {strides = array<i32: 2, 1>} : memref<8x4xf32, #tpu.memory_space<vmem>>, vector<4x4xf32>
    %48 = arith.addf %46, %47 : vector<4x4xf32>
    %cst_37 = arith.constant 5.000000e-01 : f32
    %49 = vector.broadcast %cst_37 : f32 to vector<4x4xf32>
    %50 = arith.mulf %49, %48 : vector<4x4xf32>
    %51 = math.absf %50 : vector<4x4xf32>
    %52 = vector.shape_cast %51 : vector<4x4xf32> to vector<1x4x4xf32>
    %cst_38 = arith.constant dense<0.000000e+00> : vector<1xf32>
    %53 = vector.multi_reduction <add>, %52, %cst_38 [1, 2] : vector<1x4x4xf32> to vector<1xf32>
    %54 = vector.shape_cast %53 : vector<1xf32> to vector<1x1x1xf32>
    %55 = vector.extract %54[0, 0, 0] : f32 from vector<1x1x1xf32>
    %c2 = arith.constant 2 : index
    %56 = memref.load %arg8[%c2] : memref<4xf32, #tpu.memory_space<smem>>
    %57 = arith.addf %56, %43 : f32
    %c2_39 = arith.constant 2 : index
    %58 = memref.load %arg8[%c2_39] : memref<4xf32, #tpu.memory_space<smem>>
    memref.store %57, %arg8[%c2_39] : memref<4xf32, #tpu.memory_space<smem>>
    %c3 = arith.constant 3 : index
    %59 = memref.load %arg8[%c3] : memref<4xf32, #tpu.memory_space<smem>>
    %60 = arith.addf %59, %55 : f32
    %c3_40 = arith.constant 3 : index
    %61 = memref.load %arg8[%c3_40] : memref<4xf32, #tpu.memory_space<smem>>
    memref.store %60, %arg8[%c3_40] : memref<4xf32, #tpu.memory_space<smem>>
    return
  }
  func.func @transform_0(%arg0: i32, %arg1: i32, %arg2: i32) -> (i32, i32, i32, i32) {
    %c0_i32 = arith.constant 0 : i32
    %c0_i32_0 = arith.constant 0 : i32
    return %arg0, %arg2, %arg1, %c0_i32 : i32, i32, i32, i32
  }
  func.func @transform_1(%arg0: i32, %arg1: i32, %arg2: i32) -> (i32, i32, i32, i32) {
    %c0_i32 = arith.constant 0 : i32
    %c0_i32_0 = arith.constant 0 : i32
    return %arg0, %arg2, %arg1, %c0_i32 : i32, i32, i32, i32
  }
  func.func @transform_2(%arg0: i32, %arg1: i32, %arg2: i32) -> (i32, i32, i32) {
    %c0_i32 = arith.constant 0 : i32
    %c0_i32_0 = arith.constant 0 : i32
    return %arg0, %arg1, %c0_i32 : i32, i32, i32
  }
  func.func @transform_3(%arg0: i32, %arg1: i32, %arg2: i32) -> (i32, i32) {
    %c0_i32 = arith.constant 0 : i32
    %c0_i32_0 = arith.constant 0 : i32
    %c0_i32_1 = arith.constant 0 : i32
    return %c0_i32, %c0_i32_0 : i32, i32
  }
  func.func @transform_4(%arg0: i32, %arg1: i32, %arg2: i32) -> (i32, i32) {
    %c0_i32 = arith.constant 0 : i32
    %c0_i32_0 = arith.constant 0 : i32
    %c0_i32_1 = arith.constant 0 : i32
    return %c0_i32, %c0_i32_0 : i32, i32
  }
  func.func @transform_5(%arg0: i32, %arg1: i32, %arg2: i32) -> i32 {
    %c0_i32 = arith.constant 0 : i32
    %c0_i32_0 = arith.constant 0 : i32
    return %c0_i32 : i32
  }
}

</mosaic_0001>

<llo_original>
// kernel: tpu_custom_call.1
$region0: #{tpu_custom_call.1}
  #allocation0 [shape = 'u32[]', space=smem, size = 0x4, offset = 0x4, fixed_abs, tag = 'smem constant byte address 0x4 - core index']
  #allocation1 [shape = 'u32[144,128]{1,0:T(1,128)}', space=vmem, size = 0x12000, scoped, tag = 'internal scratch']
  #allocation2 [shape = 'f32[16,8]{1,0:T(8,128)}', space=vmem, size = 0x2000, scoped, tag = 'scratch operand']
  #allocation3 [shape = 'f32[8,4]{1,0:T(8,128)}', space=vmem, size = 0x1000, scoped, tag = 'scratch operand']
  %s0 = inlined_call_operand.hbm [shape: f32[2,3,16,16], index: 0, kind: input, shape index: {}]
  %s1 = inlined_call_operand.hbm [shape: f32[2,3,16,16], index: 1, kind: input, shape index: {}]
  %s2 = inlined_call_operand.vmem [shape: f32[2,16,16], index: 2, kind: input, shape index: {}]
  %s3 = inlined_call_operand.vmem [shape: f32[16,8], index: 3, kind: input, shape index: {}]
  %s4 = inlined_call_operand.vmem [shape: f32[8,4], index: 4, kind: input, shape index: {}]
  %s5 = inlined_call_operand.hbm [shape: f32[4], index: 5, kind: output, shape index: {}]
  %s6 = sld [smem:[#allocation0]]
  $region65: #{tpu_custom_call.1} parent=0
    _
  %s8 = ssub.s32 1, %s6
  %s9 = scalar_select 0, %s8, %s6
  $region1: #{tpu_custom_call.1} parent=0
    #allocation4 [shape = 'u8[16384]{0}', space=vmem, size = 0x4000, scoped, tag = 'input window, operand 0']
    #allocation5 [shape = 's32[2]{0}', space=sflag, size = 0x8, scoped, tag = 'scoped memory for tpu_custom_call.1']
    #allocation6 [shape = 's32[2]{0}', space=sflag, size = 0x8, scoped, tag = 'scoped memory for tpu_custom_call.1']
    #allocation7 [shape = 'u8[16384]{0}', space=vmem, size = 0x4000, scoped, tag = 'input window, operand 1']
    #allocation8 [shape = 's32[2]{0}', space=sflag, size = 0x8, scoped, tag = 'scoped memory for tpu_custom_call.1']
    #allocation9 [shape = 'u8[512]{0}', space=smem, size = 0x200, scoped, tag = 'output window, operand 0, single buffered']
    %10 = vsyncpa [#allocation5], 0
    %s11 = scalar_lea.sflag [#allocation5], 1
    %12 = vsyncpa %s11, 0
    %13 = vsyncpa [#allocation8], 0
    %s14 = scalar_lea.sflag [#allocation8], 1
    %15 = vsyncpa %s14, 0
    %16 = vsyncpa [#allocation6], 0
    loop: start=0, step=1, limit=8
    $region2: #{tpu_custom_call.1} parent=1 // loop_pre_header
      _
    $region3: #{tpu_custom_call.1} parent=1 // loop_header
      %s18 = sphi 0, %s22
      %p19 = scmp.ge.s32.totalorder %s18, 8
      %s25 = sphi 0, %s44
      %s26 = sphi 0, %s40
      %s27 = sphi 0, %s36
      %s28 = sphi 0, %s25
      %s29 = sphi 0, %s26
      %s30 = sphi 0, %s27
      %s31 = sphi 0, %s28
      %s32 = sphi 0, %s29
      %s33 = sphi 0, %s30
      %s51 = sphi 0, %s53
      %s54 = sphi 0, %s51
      %s55 = sphi 0, %s54
      %s71 = sphi 0, %s55
      %s81 = sphi 0, %s83
      %s84 = sphi 0, %s81
      %s85 = sphi 0, %s84
      %s101 = sphi 0, %s85
      %s109 = sphi 0, %s111
      %s112 = sphi 0, %s109
      %s113 = sphi 0, %s112
      %s129 = sphi 0, %s113
      %s133 = sphi 0, %s133
      %s135 = sphi 0, %s133
      %s136 = sphi 0, %s135
      %s150 = sphi 0, %s136
      %s154 = sphi 0, %s154
      %s156 = sphi 0, %s154
      %s157 = sphi 0, %s156
      %s171 = sphi 0, %s157
      %s175 = sphi 0, %s175
      %s177 = sphi 0, %s175
      %s178 = sphi 0, %s177
      %s192 = sphi 0, %s178
    $region4: #{tpu_custom_call.1} parent=1 // loop_header_branch
      %21 = sbr.rel (%p19) target = $region8
    $region5: #{tpu_custom_call.1} parent=1 // loop_body
      %s23 = ssub.s32 %s18, 1
      %s24 = ssub.s32 %s18, 2
      %s34 = sadd.s32 1, %s27
      %p35 = scmp.ge.s32.totalorder %s34, 3
      %s36 = scalar_select %p35, 0, %s34
      %s37 = sadd.s32 1, %s26
      %s38 = scalar_select %p35, %s37, %s26
      %p39 = scmp.ge.s32.totalorder %s38, 1
      %s40 = scalar_select %p39, 0, %s38
      %s41 = sadd.s32 1, %s25
      %s42 = scalar_select %p39, %s41, %s25
      %p43 = scmp.ge.s32.totalorder %s42, 2
      %s44 = scalar_select %p43, 0, %s42
      %s45 = ssub.s32 %s25, %s44
      %s46 = ssub.s32 %s27, %s36
      %s47 = sor.u32 %s45, %s46
      %s48 = ssub.s32 %s26, %s40
      %s49 = sor.u32 %s47, %s48
      %p50 = scmp.eq.s32.totalorder %s49, 0
      %s52 = sadd.s32 %s51, 1
      %s53 = scalar_select %p50, %s51, %s52
      %p56 = pneg %p50
      %p57 = scmp.eq.s32.totalorder %s18, 5
      %p58 = por %p56, %p57
      %p59 = scmp.ne.s32.totalorder %s51, %s54
      %p60 = scmp.eq.s32.totalorder %s18, 0
      %p61 = por %p59, %p60
      %p62 = scmp.ne.s32.totalorder %s51, %s54
      %p63 = scmp.eq.s32.totalorder %s23, 5
      %p64 = por %p62, %p63
      %p65 = scmp.ne.s32.totalorder %s54, %s55
      %p66 = scmp.eq.s32.totalorder %s23, 0
      %p67 = por %p65, %p66
      %p68 = scmp.ne.s32.totalorder %s54, %s55
      %p69 = scmp.eq.s32.totalorder %s24, 5
      %p70 = por %p68, %p69
      %p72 = scmp.ne.s32.totalorder %s55, %s71
      %p73 = scmp.eq.s32.totalorder %s24, 0
      %p74 = por %p72, %p73
      %s75 = ssub.s32 %s25, %s44
      %s76 = ssub.s32 %s27, %s36
      %s77 = sor.u32 %s75, %s76
      %s78 = ssub.s32 %s26, %s40
      %s79 = sor.u32 %s77, %s78
      %p80 = scmp.eq.s32.totalorder %s79, 0
      %s82 = sadd.s32 %s81, 1
      %s83 = scalar_select %p80, %s81, %s82
      %p86 = pneg %p80
      %p87 = scmp.eq.s32.totalorder %s18, 5
      %p88 = por %p86, %p87
      %p89 = scmp.ne.s32.totalorder %s81, %s84
      %p90 = scmp.eq.s32.totalorder %s18, 0
      %p91 = por %p89, %p90
      %p92 = scmp.ne.s32.totalorder %s81, %s84
      %p93 = scmp.eq.s32.totalorder %s23, 5
      %p94 = por %p92, %p93
      %p95 = scmp.ne.s32.totalorder %s84, %s85
      %p96 = scmp.eq.s32.totalorder %s23, 0
      %p97 = por %p95, %p96
      %p98 = scmp.ne.s32.totalorder %s84, %s85
      %p99 = scmp.eq.s32.totalorder %s24, 5
      %p100 = por %p98, %p99
      %p102 = scmp.ne.s32.totalorder %s85, %s101
      %p103 = scmp.eq.s32.totalorder %s24, 0
      %p104 = por %p102, %p103
      %s105 = ssub.s32 %s25, %s44
      %s106 = ssub.s32 %s26, %s40
      %s107 = sor.u32 %s105, %s106
      %p108 = scmp.eq.s32.totalorder %s107, 0
      %s110 = sadd.s32 %s109, 1
      %s111 = scalar_select %p108, %s109, %s110
      %p114 = pneg %p108
      %p115 = scmp.eq.s32.totalorder %s18, 5
      %p116 = por %p114, %p115
      %p117 = scmp.ne.s32.totalorder %s109, %s112
      %p118 = scmp.eq.s32.totalorder %s18, 0
      %p119 = por %p117, %p118
      %p120 = scmp.ne.s32.totalorder %s109, %s112
      %p121 = scmp.eq.s32.totalorder %s23, 5
      %p122 = por %p120, %p121
      %p123 = scmp.ne.s32.totalorder %s112, %s113
      %p124 = scmp.eq.s32.totalorder %s23, 0
      %p125 = por %p123, %p124
      %p126 = scmp.ne.s32.totalorder %s112, %s113
      %p127 = scmp.eq.s32.totalorder %s24, 5
      %p128 = por %p126, %p127
      %p130 = scmp.ne.s32.totalorder %s113, %s129
      %p131 = scmp.eq.s32.totalorder %s24, 0
      %p132 = por %p130, %p131
      %s134 = sadd.s32 %s133, 1
      %p137 = scmp.eq.s32.totalorder %s18, 5
      %p138 = scmp.ne.s32.totalorder %s133, %s135
      %p139 = scmp.eq.s32.totalorder %s18, 0
      %p140 = por %p138, %p139
      %p141 = scmp.ne.s32.totalorder %s133, %s135
      %p142 = scmp.eq.s32.totalorder %s23, 5
      %p143 = por %p141, %p142
      %p144 = scmp.ne.s32.totalorder %s135, %s136
      %p145 = scmp.eq.s32.totalorder %s23, 0
      %p146 = por %p144, %p145
      %p147 = scmp.ne.s32.totalorder %s135, %s136
      %p148 = scmp.eq.s32.totalorder %s24, 5
      %p149 = por %p147, %p148
      %p151 = scmp.ne.s32.totalorder %s136, %s150
      %p152 = scmp.eq.s32.totalorder %s24, 0
      %p153 = por %p151, %p152
      %s155 = sadd.s32 %s154, 1
      %p158 = scmp.eq.s32.totalorder %s18, 5
      %p159 = scmp.ne.s32.totalorder %s154, %s156
      %p160 = scmp.eq.s32.totalorder %s18, 0
      %p161 = por %p159, %p160
      %p162 = scmp.ne.s32.totalorder %s154, %s156
      %p163 = scmp.eq.s32.totalorder %s23, 5
      %p164 = por %p162, %p163
      %p165 = scmp.ne.s32.totalorder %s156, %s157
      %p166 = scmp.eq.s32.totalorder %s23, 0
      %p167 = por %p165, %p166
      %p168 = scmp.ne.s32.totalorder %s156, %s157
      %p169 = scmp.eq.s32.totalorder %s24, 5
      %p170 = por %p168, %p169
      %p172 = scmp.ne.s32.totalorder %s157, %s171
      %p173 = scmp.eq.s32.totalorder %s24, 0
      %p174 = por %p172, %p173
      %s176 = sadd.s32 %s175, 1
      %p179 = scmp.eq.s32.totalorder %s18, 5
      %p180 = scmp.ne.s32.totalorder %s175, %s177
      %p181 = scmp.eq.s32.totalorder %s18, 0
      %p182 = por %p180, %p181
      %p183 = scmp.ne.s32.totalorder %s175, %s177
      %p184 = scmp.eq.s32.totalorder %s23, 5
      %p185 = por %p183, %p184
      %p186 = scmp.ne.s32.totalorder %s177, %s178
      %p187 = scmp.eq.s32.totalorder %s23, 0
      %p188 = por %p186, %p187
      %p189 = scmp.ne.s32.totalorder %s177, %s178
      %p190 = scmp.eq.s32.totalorder %s24, 5
      %p191 = por %p189, %p190
      %p193 = scmp.ne.s32.totalorder %s178, %s192
      %p194 = scmp.eq.s32.totalorder %s24, 0
      %p195 = por %p193, %p194
      %p196 = scmp.le.s32.totalorder 1, %s18
      %p197 = scmp.lt.s32.totalorder %s18, 7
      %p198 = pnand %p196, %p197
      %p199 = pneg %p198
      // Predicated region
      $region9: #{tpu_custom_call.1} parent=5 // pred_check
        _
      $region10: #{tpu_custom_call.1} parent=5 // pred_check_branch
        %201 = sbr.rel (%p198) target = $region12
      $region11: #{tpu_custom_call.1} parent=5 // pred_region
        %s202 = ssub.s32 %s18, 1
        // Predicated region
        $region13: #{tpu_custom_call.1} parent=11 // pred_check
          %p203 = pneg %p146
        $region14: #{tpu_custom_call.1} parent=11 // pred_check_branch
          %205 = sbr.rel (%p203) target = $region16
        $region15: #{tpu_custom_call.1} parent=11 // pred_region
          _
        $region16: #{tpu_custom_call.1} parent=11 // pred_fallthru
          _
        // Predicated region
        $region17: #{tpu_custom_call.1} parent=11 // pred_check
          %p206 = pneg %p167
        $region18: #{tpu_custom_call.1} parent=11 // pred_check_branch
          %208 = sbr.rel (%p206) target = $region20
        $region19: #{tpu_custom_call.1} parent=11 // pred_region
          _
        $region20: #{tpu_custom_call.1} parent=11 // pred_fallthru
          _
      $region12: #{tpu_custom_call.1} parent=5 // pred_fallthru
        _
      %p209 = scmp.lt.s32.totalorder %s18, 6
      // Predicated region
      $region21: #{tpu_custom_call.1} parent=5 // pred_check
        %p210 = pneg %p209
      $region22: #{tpu_custom_call.1} parent=5 // pred_check_branch
        %212 = sbr.rel (%p210) target = $region24
      $region23: #{tpu_custom_call.1} parent=5 // pred_region
        // Predicated region
        $region25: #{tpu_custom_call.1} parent=23 // pred_check
          %p213 = pneg %p61
        $region26: #{tpu_custom_call.1} parent=23 // pred_check_branch
          %215 = sbr.rel (%p213) target = $region28
        $region27: #{tpu_custom_call.1} parent=23 // pred_region
          %s216 = sand.u32 %s51, 1
          %s217 = scalar_lea.sflag [#allocation5], %s216
          %s218 = sand.u32 %s51, 1
          %s219 = smul.addr %s218, 16
          %s220 = scalar_lea.vmem [#allocation4], %s219
          %s221 = smul.u32 2, %s26
          %s223 = ssub.s32 256, 256
          %224 = vsyncadd %s217, %s223
          %s225 = smul.addr %s27, 2
          %s226 = sadd.s32 %s221, %s225
          %s227 = smul.addr %s25, 6
          %s228 = sadd.s32 %s226, %s227
          %s229 = smul.addr %s228, 128
          %s230 = scalar_lea.hbm %s0, %s229
          %s231 = sshll.u32 %s220, 4
          %s232 = int_to_ptr.vmem [resolvable:$true] %s231
          %237 = dma.hbm_to_vmem [thread:$0]  %s230, 256, %s232, %s217, 128, 128, 8
        $region28: #{tpu_custom_call.1} parent=23 // pred_fallthru
          _
        // Predicated region
        $region29: #{tpu_custom_call.1} parent=23 // pred_check
          %p238 = pneg %p91
        $region30: #{tpu_custom_call.1} parent=23 // pred_check_branch
          %240 = sbr.rel (%p238) target = $region32
        $region31: #{tpu_custom_call.1} parent=23 // pred_region
          %s241 = sand.u32 %s81, 1
          %s242 = scalar_lea.sflag [#allocation8], %s241
          %s243 = sand.u32 %s81, 1
          %s244 = smul.addr %s243, 16
          %s245 = scalar_lea.vmem [#allocation7], %s244
          %s246 = smul.u32 2, %s26
          %s248 = ssub.s32 256, 256
          %249 = vsyncadd %s242, %s248
          %s250 = smul.addr %s27, 2
          %s251 = sadd.s32 %s246, %s250
          %s252 = smul.addr %s25, 6
          %s253 = sadd.s32 %s251, %s252
          %s254 = smul.addr %s253, 128
          %s255 = scalar_lea.hbm %s1, %s254
          %s256 = sshll.u32 %s245, 4
          %s257 = int_to_ptr.vmem [resolvable:$true] %s256
          %262 = dma.hbm_to_vmem [thread:$0]  %s255, 256, %s257, %s242, 128, 128, 8
        $region32: #{tpu_custom_call.1} parent=23 // pred_fallthru
          _
        // Predicated region
        $region33: #{tpu_custom_call.1} parent=23 // pred_check
          %p263 = pneg %p119
        $region34: #{tpu_custom_call.1} parent=23 // pred_check_branch
          %265 = sbr.rel (%p263) target = $region36
        $region35: #{tpu_custom_call.1} parent=23 // pred_region
          %s266 = smul.u32 2, %s26
          %p267 = scmp.lt.s32.totalorder %s25, 1
          %s268 = scalar_select %p267, %s25, 1
          %p269 = scmp.lt.s32.totalorder %s266, 1
          %s270 = scalar_select %p269, %s266, 1
          %s271 = smul.addr %s268, 2
          %s272 = sadd.s32 %s270, %s271
          %s273 = smul.addr %s272, 8
          %s274 = scalar_lea.vmem %s2, %s273
          %s275 = smul.u32 2, %s26
        $region36: #{tpu_custom_call.1} parent=23 // pred_fallthru
          _
      $region24: #{tpu_custom_call.1} parent=5 // pred_fallthru
        _
      %p276 = scmp.le.s32.totalorder 1, %s18
      %p277 = scmp.lt.s32.totalorder %s18, 7
      %p278 = pnand %p276, %p277
      %p279 = pneg %p278
      // Predicated region
      $region37: #{tpu_custom_call.1} parent=5 // pred_check
        _
      $region38: #{tpu_custom_call.1} parent=5 // pred_check_branch
        %281 = sbr.rel (%p278) target = $region40
      $region39: #{tpu_custom_call.1} parent=5 // pred_region
        %s282 = ssub.s32 %s18, 1
        %s283 = sand.u32 %s54, 1
        %s284 = scalar_lea.sflag [#allocation5], %s283
        %s285 = sand.u32 %s54, 1
        %s286 = smul.addr %s285, 16
        %s287 = scalar_lea.vmem [#allocation4], %s286
        // Predicated region
        $region41: #{tpu_custom_call.1} parent=39 // pred_check
          %p288 = pneg %p67
        $region42: #{tpu_custom_call.1} parent=39 // pred_check_branch
          %290 = sbr.rel (%p288) target = $region44
        $region43: #{tpu_custom_call.1} parent=39 // pred_region
          %291 = dma.done %s284, 256
        $region44: #{tpu_custom_call.1} parent=39 // pred_fallthru
          _
        %s292 = sand.u32 %s84, 1
        %s293 = scalar_lea.sflag [#allocation8], %s292
        %s294 = sand.u32 %s84, 1
        %s295 = smul.addr %s294, 16
        %s296 = scalar_lea.vmem [#allocation7], %s295
        // Predicated region
        $region45: #{tpu_custom_call.1} parent=39 // pred_check
          %p297 = pneg %p97
        $region46: #{tpu_custom_call.1} parent=39 // pred_check_branch
          %299 = sbr.rel (%p297) target = $region48
        $region47: #{tpu_custom_call.1} parent=39 // pred_region
          %300 = dma.done %s293, 256
        $region48: #{tpu_custom_call.1} parent=39 // pred_fallthru
          _
        %s301 = sand.u32 %s54, 1
        %s302 = scalar_lea.sflag [#allocation5], %s301
        %s303 = sand.u32 %s54, 1
        %s304 = smul.addr %s303, 16
        %s305 = scalar_lea.vmem [#allocation4], %s304
        %p306 = pneg %p67
        %p307 = pneg %p64
        %s308 = sand.u32 %s84, 1
        %s309 = scalar_lea.sflag [#allocation8], %s308
        %s310 = sand.u32 %s84, 1
        %s311 = smul.addr %s310, 16
        %s312 = scalar_lea.vmem [#allocation7], %s311
        %p313 = pneg %p97
        %p314 = pneg %p94
        %s315 = smul.u32 2, %s29
        %p316 = scmp.lt.s32.totalorder %s28, 1
        %s317 = scalar_select %p316, %s28, 1
        %p318 = scmp.lt.s32.totalorder %s315, 1
        %s319 = scalar_select %p318, %s315, 1
        %s320 = smul.addr %s317, 2
        %s321 = sadd.s32 %s319, %s320
        %s322 = smul.addr %s321, 8
        %s323 = scalar_lea.vmem %s2, %s322
        %p324 = pneg %p125
        %p325 = pneg %p122
        %p326 = pneg %p146
        %p327 = pneg %p143
        %p328 = pneg %p167
        %p329 = pneg %p164
        %p330 = pneg %p188
        %p331 = pneg %p185
        %s332 = smul.u32 2, %s29
        %s333 = smul.u32 2, %s29
        %s334 = smul.u32 2, %s29
        %p335 = scmp.lt.s32.totalorder %s28, 1
        %s336 = scalar_select %p335, %s28, 1
        %p337 = scmp.lt.s32.totalorder %s334, 1
        %s338 = scalar_select %p337, %s334, 1
        %s339 = smul.addr %s336, 2
        %s340 = sadd.s32 %s338, %s339
        %s341 = smul.addr %s340, 8
        %s342 = scalar_lea.vmem %s2, %s341
        %s343 = smul.u32 2, %s29
        %p344 = scmp.eq.s32.totalorder %s28, 0
        %p345 = scmp.eq.s32.totalorder %s29, 0
        %p346 = pnand %p344, %p345
        %p347 = pneg %p346
        %p348 = scmp.eq.s32.totalorder %s30, 0
        %p349 = pnand %p347, %p348
        %p350 = pneg %p349
        // Predicated region
        $region49: #{tpu_custom_call.1} parent=39 // pred_check
          _
        $region50: #{tpu_custom_call.1} parent=39 // pred_check_branch
          %352 = sbr.rel (%p349) target = $region52
        $region51: #{tpu_custom_call.1} parent=39 // pred_region
          %s353 = scalar_lea.smem [#allocation9], 0
          %354 = sst [smem:[%s353]] 0.0
          %s355 = scalar_lea.smem [#allocation9], 1
          %356 = sst [smem:[%s355]] 0.0
          %s357 = scalar_lea.smem [#allocation9], 2
          %358 = sst [smem:[%s357]] 0.0
          %s359 = scalar_lea.smem [#allocation9], 3
          %360 = sst [smem:[%s359]] 0.0
        $region52: #{tpu_custom_call.1} parent=39 // pred_fallthru
          _
        %v361 = vld [vmem:[%s287] sm:$0xff]
        %v362 = vld [vmem:[%s287 + $0x8] sm:$0xff]
        %v363 = vld [vmem:[%s296] sm:$0xff]
        %v364 = vld [vmem:[%s296 + $0x8] sm:$0xff]
        %v365 = vsub.f32 %v361, %v363
        %v366 = vsub.f32 %v362, %v364
        %v367 = vld [vmem:[%s342] sm:$0xff]
        %v368 = vld [vmem:[%s342 + $0x8] sm:$0xff]
        %s369 = sld [smem:[#allocation9]]
        %v370 = vand.u32 2147483647, %v365
        %v371 = vand.u32 2147483647, %v366
        %v372 = vmul.f32 %v370, %v367
        %v373 = vmul.f32 %v371, %v368
        %vm374 = vcmask 130048
        %v375 = vsel %vm374, %v372, 0.0
        %v376 = vsel %vm374, %v373, 0.0
        %v377 = vadd.f32 %v375, %v376
        %378 = vadd.xlane.f32.xlu0 %v377
        %v379 = vpop.xlane.xlu0 %378
        %v380 = vrot.slane %v379, 4
        %v381 = vadd.f32 %v379, %v380
        %v382 = vrot.slane %v381, 2
        %v383 = vadd.f32 %v381, %v382
        %v384 = vrot.slane %v383, 1
        %v385 = vadd.f32 %v383, %v384
        %s386 = vtos %v385
        %s387 = sadd.f32 %s369, %s386
        %s388 = scalar_lea.smem [#allocation9], 0
        %389 = sst [smem:[%s388]] %s387
        %s390 = sld [smem:[#allocation9 + $0x1]]
        %v391 = vsel %vm374, %v367, 0.0
        %v392 = vsel %vm374, %v368, 0.0
        %v393 = vadd.f32 %v391, %v392
        %394 = vadd.xlane.f32.xlu0 %v393
        %v395 = vpop.xlane.xlu0 %394
        %v396 = vrot.slane %v395, 4
        %v397 = vadd.f32 %v395, %v396
        %v398 = vrot.slane %v397, 2
        %v399 = vadd.f32 %v397, %v398
        %v400 = vrot.slane %v399, 1
        %v401 = vadd.f32 %v399, %v400
        %s402 = vtos %v401
        %s403 = sadd.f32 %s390, %s402
        %s404 = scalar_lea.smem [#allocation9], 1
        %405 = sst [smem:[%s404]] %s403
        %v406 = vld [vmem:[%s3] sm:$0xff]
        %v407 = vld [vmem:[%s3 + $0x8] sm:$0xff]
        %v408 = vld [vmem:[%s4] sm:$0xff]
        %v410 = vsel %vm374, %v365, 0
        %v413 = vsel %vm374, %v366, 0
        %415 = vmatprep.subr.mxu0 0.0
        %416 = vmatpush1.msra.mxu0 %v406
        %417 = vmatprep.subr.mxu0 0.0
        %418 = vmatpush1.msra.mxu0 %v407
        %419 = vmatprep.subr.mxu0 0.0
        %420 = vmatpush1.msra.mxu0 0.0
        %421 = vmatprep.subr.mxu0 0.0
        %422 = vmatpush1.msra.mxu0 0.0
        %423 = vmatprep.subr.mxu0 0.0
        %424 = vmatpush1.msra.mxu0 0.0
        %425 = vmatprep.subr.mxu0 0.0
        %426 = vmatpush1.msra.mxu0 0.0
        %427 = vmatprep.subr.mxu0 0.0
        %428 = vmatpush1.msra.mxu0 0.0
        %429 = vmatprep.subr.mxu0 0.0
        %430 = vmatpush1.msra.mxu0 0.0
        %431 = vmatprep.subr.mxu0 0.0
        %432 = vmatpush1.msra.mxu0 0.0
        %433 = vmatprep.subr.mxu0 0.0
        %434 = vmatpush1.msra.mxu0 0.0
        %435 = vmatprep.subr.mxu0 0.0
        %436 = vmatpush1.msra.mxu0 0.0
        %437 = vmatprep.subr.mxu0 0.0
        %438 = vmatpush1.msra.mxu0 0.0
        %439 = vmatprep.subr.mxu0 0.0
        %440 = vmatpush1.msra.mxu0 0.0
        %441 = vmatprep.subr.mxu0 0.0
        %442 = vmatpush1.msra.mxu0 0.0
        %443 = vmatprep.subr.mxu0 0.0
        %444 = vmatpush1.msra.mxu0 0.0
        %445 = vmatprep.subr.mxu0 0.0
        %446 = vmatpush1.msra.mxu0 0.0
        %447 = vmatprep.subr.mxu0 0.0
        %448 = vmatpush1.msra.mxu0 0.0
        %449 = vmatprep.subr.mxu0 0.0
        %450 = vmatpush1.msra.mxu0 0.0
        %451 = vmatprep.subr.mxu0 0.0
        %452 = vmatpush1.msra.mxu0 0.0
        %453 = vmatprep.subr.mxu0 0.0
        %454 = vmatpush1.msra.mxu0 0.0
        %455 = vmatprep.subr.mxu0 0.0
        %456 = vmatpush1.msra.mxu0 0.0
        %457 = vmatprep.subr.mxu0 0.0
        %458 = vmatpush1.msra.mxu0 0.0
        %459 = vmatprep.subr.mxu0 0.0
        %460 = vmatpush1.msra.mxu0 0.0
        %461 = vmatprep.subr.mxu0 0.0
        %462 = vmatpush1.msra.mxu0 0.0
        %463 = vmatprep.subr.mxu0 0.0
        %464 = vmatpush1.msra.mxu0 0.0
        %465 = vmatprep.subr.mxu0 0.0
        %466 = vmatpush1.msra.mxu0 0.0
        %467 = vmatprep.subr.mxu0 0.0
        %468 = vmatpush1.msra.mxu0 0.0
        %469 = vmatprep.subr.mxu0 0.0
        %470 = vmatpush1.msra.mxu0 0.0
        %471 = vmatprep.subr.mxu0 0.0
        %472 = vmatpush1.msra.mxu0 0.0
        %473 = vmatprep.subr.mxu0 0.0
        %474 = vmatpush1.msra.mxu0 0.0
        %475 = vmatprep.subr.mxu0 0.0
        %476 = vmatpush1.msra.mxu0 0.0
        %477 = vmatprep.subr.mxu0 0.0
        %478 = vmatpush1.msra.mxu0 0.0
        %479 = vmatprep.mubr.f32.mxu0 0.0
        %480 = vmatmul.mubr.f32.gmra.mrb[0].mxu0 %v410
        %v481 = vpop.f32.mrb[0].mxu0
        %v482 = vadd.f32 0.0, %v481
        %v483 = vpop.f32.mrb[0].mxu0
        %484 = vmatprep.mubr.f32.mxu0 0.0
        %485 = vmatmul.mubr.f32.gmra.mrb[0].mxu0 %v413
        %v486 = vpop.f32.mrb[0].mxu0
        %v487 = vadd.f32 0.0, %v486
        %v488 = vpop.f32.mrb[0].mxu0
        %489 = vdwg.mxu0
        %vm490 = vcmask 64512
        %491 = vst.msk [vmem:[#allocation2] sm:$0xff] %vm490, %v482
        %492 = vst.msk [vmem:[#allocation2 + $0x8] sm:$0xff] %vm490, %v487
        %v493 = vld [vmem:[#allocation2] ss:$2 sm:$0xff]
        %s494 = scalar_lea.vmem [#allocation2], 1
        %v495 = vld [vmem:[%s494] ss:$2 sm:$0xff]
        %v496 = vadd.f32 %v493, %v495
        %v497 = vmul.f32 %v496, 0.5
        %v498 = vand.u32 2147483647, %v497
        %v499 = vsel %vm490, %v498, 0.0
        %500 = vadd.xlane.f32.xlu0 %v499
        %v501 = vpop.xlane.xlu0 %500
        %v502 = vrot.slane %v501, 4
        %v503 = vadd.f32 %v501, %v502
        %v504 = vrot.slane %v503, 2
        %v505 = vadd.f32 %v503, %v504
        %v506 = vrot.slane %v505, 1
        %v507 = vadd.f32 %v505, %v506
        %s508 = vtos %v507
        %v510 = vsel %vm490, %v497, 0
        %512 = vmatprep.subr.mxu0 0.0
        %513 = vmatpush1.msra.mxu0 %v408
        %514 = vmatprep.subr.mxu0 0.0
        %515 = vmatpush1.msra.mxu0 0.0
        %516 = vmatprep.subr.mxu0 0.0
        %517 = vmatpush1.msra.mxu0 0.0
        %518 = vmatprep.subr.mxu0 0.0
        %519 = vmatpush1.msra.mxu0 0.0
        %520 = vmatprep.subr.mxu0 0.0
        %521 = vmatpush1.msra.mxu0 0.0
        %522 = vmatprep.subr.mxu0 0.0
        %523 = vmatpush1.msra.mxu0 0.0
        %524 = vmatprep.subr.mxu0 0.0
        %525 = vmatpush1.msra.mxu0 0.0
        %526 = vmatprep.subr.mxu0 0.0
        %527 = vmatpush1.msra.mxu0 0.0
        %528 = vmatprep.subr.mxu0 0.0
        %529 = vmatpush1.msra.mxu0 0.0
        %530 = vmatprep.subr.mxu0 0.0
        %531 = vmatpush1.msra.mxu0 0.0
        %532 = vmatprep.subr.mxu0 0.0
        %533 = vmatpush1.msra.mxu0 0.0
        %534 = vmatprep.subr.mxu0 0.0
        %535 = vmatpush1.msra.mxu0 0.0
        %536 = vmatprep.subr.mxu0 0.0
        %537 = vmatpush1.msra.mxu0 0.0
        %538 = vmatprep.subr.mxu0 0.0
        %539 = vmatpush1.msra.mxu0 0.0
        %540 = vmatprep.subr.mxu0 0.0
        %541 = vmatpush1.msra.mxu0 0.0
        %542 = vmatprep.subr.mxu0 0.0
        %543 = vmatpush1.msra.mxu0 0.0
        %544 = vmatprep.subr.mxu0 0.0
        %545 = vmatpush1.msra.mxu0 0.0
        %546 = vmatprep.subr.mxu0 0.0
        %547 = vmatpush1.msra.mxu0 0.0
        %548 = vmatprep.subr.mxu0 0.0
        %549 = vmatpush1.msra.mxu0 0.0
        %550 = vmatprep.subr.mxu0 0.0
        %551 = vmatpush1.msra.mxu0 0.0
        %552 = vmatprep.subr.mxu0 0.0
        %553 = vmatpush1.msra.mxu0 0.0
        %554 = vmatprep.subr.mxu0 0.0
        %555 = vmatpush1.msra.mxu0 0.0
        %556 = vmatprep.subr.mxu0 0.0
        %557 = vmatpush1.msra.mxu0 0.0
        %558 = vmatprep.subr.mxu0 0.0
        %559 = vmatpush1.msra.mxu0 0.0
        %560 = vmatprep.subr.mxu0 0.0
        %561 = vmatpush1.msra.mxu0 0.0
        %562 = vmatprep.subr.mxu0 0.0
        %563 = vmatpush1.msra.mxu0 0.0
        %564 = vmatprep.subr.mxu0 0.0
        %565 = vmatpush1.msra.mxu0 0.0
        %566 = vmatprep.subr.mxu0 0.0
        %567 = vmatpush1.msra.mxu0 0.0
        %568 = vmatprep.subr.mxu0 0.0
        %569 = vmatpush1.msra.mxu0 0.0
        %570 = vmatprep.subr.mxu0 0.0
        %571 = vmatpush1.msra.mxu0 0.0
        %572 = vmatprep.subr.mxu0 0.0
        %573 = vmatpush1.msra.mxu0 0.0
        %574 = vmatprep.subr.mxu0 0.0
        %575 = vmatpush1.msra.mxu0 0.0
        %576 = vmatprep.mubr.f32.mxu0 0.0
        %577 = vmatmul.mubr.f32.gmra.mrb[0].mxu0 %v510
        %v578 = vpop.f32.mrb[0].mxu0
        %v579 = vadd.f32 0.0, %v578
        %v580 = vpop.f32.mrb[0].mxu0
        %581 = vdwg.mxu0
        %vm582 = vcmask 31744
        %583 = vst.msk [vmem:[#allocation3] sm:$0xff] %vm582, %v579
        %v584 = vld [vmem:[#allocation3] ss:$2 sm:$0xf]
        %s585 = scalar_lea.vmem [#allocation3], 1
        %v586 = vld [vmem:[%s585] ss:$2 sm:$0xf]
        %v587 = vadd.f32 %v584, %v586
        %v588 = vmul.f32 %v587, 0.5
        %v589 = vand.u32 2147483647, %v588
        %vm590 = vcmask 27648
        %v591 = vsel %vm590, %v589, 0.0
        %592 = vadd.xlane.f32.xlu0 %v591
        %v593 = vpop.xlane.xlu0 %592
        %v594 = vrot.slane %v593, 4
        %v595 = vadd.f32 %v593, %v594
        %v596 = vrot.slane %v595, 2
        %v597 = vadd.f32 %v595, %v596
        %v598 = vrot.slane %v597, 1
        %v599 = vadd.f32 %v597, %v598
        %s600 = vtos %v599
        %s601 = sld [smem:[#allocation9 + $0x2]]
        %s602 = sadd.f32 %s601, %s508
        %s603 = scalar_lea.smem [#allocation9], 2
        %604 = sst [smem:[%s603]] %s602
        %s605 = sld [smem:[#allocation9 + $0x3]]
        %s606 = sadd.f32 %s605, %s600
        %s607 = scalar_lea.smem [#allocation9], 3
        %608 = sst [smem:[%s607]] %s606
        // Predicated region
        $region53: #{tpu_custom_call.1} parent=39 // pred_check
          %p609 = pneg %p185
        $region54: #{tpu_custom_call.1} parent=39 // pred_check_branch
          %611 = sbr.rel (%p609) target = $region56
        $region55: #{tpu_custom_call.1} parent=39 // pred_region
          %s613 = ssub.s32 16, 16
          %614 = vsyncadd [#allocation6], %s613
          %617 = dma.smem_to_hbm [#allocation9], 16, %s5, [#allocation6]
        $region56: #{tpu_custom_call.1} parent=39 // pred_fallthru
          _
        // Predicated region
        $region57: #{tpu_custom_call.1} parent=39 // pred_check
          %p618 = pneg %p185
        $region58: #{tpu_custom_call.1} parent=39 // pred_check_branch
          %620 = sbr.rel (%p618) target = $region60
        $region59: #{tpu_custom_call.1} parent=39 // pred_region
          %621 = dma.done [#allocation6], 16
        $region60: #{tpu_custom_call.1} parent=39 // pred_fallthru
          _
        %622 = sfence
      $region40: #{tpu_custom_call.1} parent=5 // pred_fallthru
        _
      %p623 = scmp.le.s32.totalorder 2, %s18
      // Predicated region
      $region61: #{tpu_custom_call.1} parent=5 // pred_check
        %p624 = pneg %p623
      $region62: #{tpu_custom_call.1} parent=5 // pred_check_branch
        %626 = sbr.rel (%p624) target = $region64
      $region63: #{tpu_custom_call.1} parent=5 // pred_region
        %s627 = ssub.s32 %s18, 2
      $region64: #{tpu_custom_call.1} parent=5 // pred_fallthru
        _
    $region6: #{tpu_custom_call.1} parent=1 // loop_footer
      %s22 = sadd.s32 1, %s18
    $region7: #{tpu_custom_call.1} parent=1 // loop_footer_branch
      %17 = sbr.rel target = $region3
    $region8: #{tpu_custom_call.1} parent=1 // loop_exit
      _
    %628 = vsyncpa [#allocation5], 1
    %s629 = scalar_lea.sflag [#allocation5], 1
    %630 = vsyncpa %s629, 1
    %631 = vsyncpa [#allocation8], 1
    %s632 = scalar_lea.sflag [#allocation8], 1
    %633 = vsyncpa %s632, 1
    %634 = vsyncpa [#allocation6], 1
    %s635 = scalar_lea.sflag [#allocation6], 1
    %636 = vsyncpa %s635, 1

</llo_original>
